<compile_context>
chip_gen: v7x
topology: tpu7x:2x2x1
jax: 0.10.0
libtpu: 0.0.40
codegen_flags: <defaults>
</compile_context>

<pallas_src>
import numpy as np

import jax
import jax.numpy as jnp
from jax.experimental import pallas as pl
from jax.experimental.pallas import tpu as pltpu


# ----------------------------------------------------------------------------
# Bilinear operators (PyTorch align_corners=False semantics), built with numpy
# so they are compile-time constants (no per-call trace).
# ----------------------------------------------------------------------------
def _bilinear_matrix_1d(n_in, scale):
    n_out = n_in * scale
    i = np.arange(n_out, dtype=np.float64)
    src = np.maximum((i + 0.5) / scale - 0.5, 0.0)
    i0 = np.minimum(np.floor(src).astype(np.int64), n_in - 1)
    i1 = np.minimum(i0 + 1, n_in - 1)
    frac = (src - i0).astype(np.float32)
    A = np.zeros((n_out, n_in), np.float32)
    A[np.arange(n_out), i0] += 1.0 - frac
    A[np.arange(n_out), i1] += frac
    return A           # rows sum to 1  -> bias commutes through the upsample


def _kron_upsample_T(Hs, Ws, scale):
    """kron(Ah, Aw)^T : [Hs*Ws, Hout*Wout].  x4 weights are multiples of 1/64,
    exact in bf16."""
    Ah = _bilinear_matrix_1d(Hs, scale)       # [Hout, Hs]
    Aw = _bilinear_matrix_1d(Ws, scale)       # [Wout, Ws]
    return np.kron(Ah, Aw).T.copy()           # [(h*Ws+w), (oh*Wout+ow)]


# ----------------------------------------------------------------------------
# Fused Pallas kernel:  conv3x3 (one K=9*Cin matmul)  +  x4 bilinear (one
# kron-operator matmul)  +  bias, stored lane-dense in NCHW layout.
# ----------------------------------------------------------------------------
def _make_fused_head_kernel():
    def kernel(xT_ref, wT_ref, kronT_ref, b_ref, o_ref):
        # (1) 3x3 conv as ONE K = 9*Cin matmul, channels-first result.
        #     [Cout, 9*Cin] @ [9*Cin, Hs*Ws]  (bf16 in, f32 acc)
        conv = jnp.dot(wT_ref[...], xT_ref[...],
                       preferred_element_type=jnp.float32)      # [Cout, S]

        # (2) x4 bilinear upsample as ONE matmul against kron(Ah, Aw)^T.
        #     Single bf16 cast of the intermediate; f32 accumulation.
        up = jnp.dot(conv.astype(jnp.bfloat16), kronT_ref[...],
                     preferred_element_type=jnp.float32)        # [Cout, Hout*Wout]

        # (3) bias folded in after the upsample (bilinear rows sum to 1);
        #     lane-dense (Cout, Hout*Wout) == NCHW memory layout.
        o_ref[...] = up + b_ref[...]
    return kernel


def seg_head_fused(seg_nhwc, w_fin, b_fin):
    """Fused `self.up4(self.fin(seg))`.

    seg_nhwc: [N, Hs, Ws, Cin]   (decoder output, NHWC)
    w_fin   : [Cout, Cin, 3, 3]  (PyTorch Conv2d layout)
    b_fin   : [Cout]
    returns : [N, Cout, 4*Hs, 4*Ws]  (NCHW, float32)
    """
    N, Hs, Ws, Cin = seg_nhwc.shape
    Cout = w_fin.shape[0]
    Hout, Wout = 4 * Hs, 4 * Ws
    S, HWout = Hs * Ws, Hout * Wout
    K = 9 * Cin

    # Build the im2col slab K-major DIRECTLY: transpose the small, un-duplicated
    # decoder output to NCHW first, then take the 9 shifted spatial views.
    # (No transpose of the 9x-duplicated slab; layout plumbing only.)
    # TODO(synk): at production resolution move im2col in-kernel (DMA the haloed
    # tile once, 9 accumulated matmuls against a resident wT).
    seg_nchw = jnp.transpose(seg_nhwc, (0, 3, 1, 2)).astype(jnp.bfloat16)  # [N,Cin,Hs,Ws]
    xp = jnp.pad(seg_nchw, ((0, 0), (0, 0), (1, 1), (1, 1)))
    taps = [xp[:, :, dy:dy + Hs, dx:dx + Ws] for dy in range(3) for dx in range(3)]
    xT = jnp.stack(taps, axis=1).reshape(N, K, S)        # K = tap*Cin + c, bf16

    # Weights: [Cout, Cin, 3, 3] -> [Cout, 9*Cin]  (tap-major, matching im2col).
    wT = jnp.transpose(w_fin, (0, 2, 3, 1)).reshape(Cout, K).astype(jnp.bfloat16)
    bias = b_fin.reshape(Cout, 1).astype(jnp.float32)

    # kron(Ah, Aw)^T : [S, Hout*Wout] compile-time constant, exact in bf16.
    kronT = jnp.asarray(_kron_upsample_T(Hs, Ws, 4), jnp.bfloat16)

    out_flat = pl.pallas_call(
        _make_fused_head_kernel(),
        out_shape=jax.ShapeDtypeStruct((N, Cout, HWout), jnp.float32),
        grid=(N,),
        in_specs=[
            pl.BlockSpec((None, K, S), lambda n: (n, 0, 0)),
            pl.BlockSpec((Cout, K), lambda n: (0, 0)),
            pl.BlockSpec((S, HWout), lambda n: (0, 0)),
            pl.BlockSpec((Cout, 1), lambda n: (0, 0)),
        ],
        out_specs=pl.BlockSpec((None, Cout, HWout), lambda n: (n, 0, 0)),
        compiler_params=pltpu.CompilerParams(
            dimension_semantics=("parallel",)),   # >=2 parallel steps -> both v7x TCs
    )(xT, wT, kronT, bias)

    # Free reshape: (N, Cout, Hout*Wout) and (N, Cout, Hout, Wout) share a layout.
    return out_flat.reshape(N, Cout, Hout, Wout)


# ----------------------------------------------------------------------------
# Encoder / decoder stand-in (plain JAX glue)
# ----------------------------------------------------------------------------
# TODO(synk): mit_b2 / light.lightdecoder definitions are not provided; deterministic
# stride-4 patch-embed projection to f_c[0]=64 channels stands in for encoder+decoder.
def encdec_standin(rgb_nchw, w_patch):
    N, C, H, W = rgb_nchw.shape
    x = jnp.transpose(rgb_nchw, (0, 2, 3, 1))                        # NHWC
    x = x.reshape(N, H // 4, 4, W // 4, 4, C)
    x = x.transpose(0, 1, 3, 2, 4, 5).reshape(N, H // 4, W // 4, 16 * C)
    return x @ w_patch                                               # [N, H/4, W/4, 64]


# ----------------------------------------------------------------------------
# Full forward (mirrors seg_seg.forward)
# ----------------------------------------------------------------------------
@jax.jit
def seg_seg_forward(rgb_nchw, w_patch, w_fin, b_fin):
    seg = encdec_standin(rgb_nchw, w_patch)          # [N, Hs, Ws, 64]  (stand-in)
    return seg_head_fused(seg, w_fin, b_fin)         # [N, 41, H, W]    (fused Pallas)


if __name__ == "__main__":
    key = jax.random.PRNGKey(0)
    k1, k2, k3, k4 = jax.random.split(key, 4)

    N, H, W = 2, 32, 32
    f_c0, num_classes = 64, 41

    # PyTorch-style NCHW input
    rgb = jax.random.normal(k1, (N, 3, H, W), jnp.float32)

    # Deterministic parameter init (Conv2d weight in torch [Cout, Cin, kH, kW] layout)
    w_patch = jax.random.normal(k2, (16 * 3, f_c0), jnp.float32) * 0.1
    w_fin = jax.random.normal(k3, (num_classes, f_c0, 3, 3), jnp.float32) \
        * (1.0 / (3 * 3 * f_c0) ** 0.5)
    b_fin = jax.random.normal(k4, (num_classes,), jnp.float32) * 0.01

    pred = seg_seg_forward(rgb, w_patch, w_fin, b_fin)
    pred = jax.block_until_ready(pred)

    assert pred.shape == (N, num_classes, H, W), pred.shape
    assert pred.dtype == jnp.float32
    print("KERNEL_OK")
</pallas_src>

<mosaic_0001>
module attributes {stable_mosaic.version = 11 : i64} {
  func.func @kernel(%arg0: i32, %arg1: memref<1x576x64xbf16, #tpu.memory_space<vmem>>, %arg2: memref<41x576xbf16, #tpu.memory_space<vmem>>, %arg3: memref<64x1024xbf16, #tpu.memory_space<vmem>>, %arg4: memref<41x1xf32, #tpu.memory_space<vmem>>, %arg5: memref<1x41x1024xf32, #tpu.memory_space<vmem>>) attributes {dimension_semantics = [#tpu.dimension_semantics<parallel>], iteration_bounds = array<i64: 2>, scalar_prefetch = 0 : i64, scratch_operands = 0 : i64, tpu.core_type = #tpu.core_type<tc>, window_params = [{transform_indices = @transform_0, window_bounds = array<i64: 1, 576, 64>}, {pipeline_mode = #tpu.pipeline_mode<synchronous>, transform_indices = @transform_1, window_bounds = array<i64: 41, 576>}, {pipeline_mode = #tpu.pipeline_mode<synchronous>, transform_indices = @transform_2, window_bounds = array<i64: 64, 1024>}, {pipeline_mode = #tpu.pipeline_mode<synchronous>, transform_indices = @transform_3, window_bounds = array<i64: 41, 1>}, {transform_indices = @transform_4, window_bounds = array<i64: 1, 41, 1024>}]} {
    %c0 = arith.constant 0 : index
    %c0_0 = arith.constant 0 : index
    %0 = vector.load %arg2[%c0, %c0_0] : memref<41x576xbf16, #tpu.memory_space<vmem>>, vector<41x576xbf16>
    %c0_1 = arith.constant 0 : index
    %c0_2 = arith.constant 0 : index
    %c0_3 = arith.constant 0 : index
    %1 = vector.load %arg1[%c0_1, %c0_2, %c0_3] : memref<1x576x64xbf16, #tpu.memory_space<vmem>>, vector<1x576x64xbf16>
    %2 = vector.shape_cast %1 : vector<1x576x64xbf16> to vector<576x64xbf16>
    %cst = arith.constant dense<0.000000e+00> : vector<41x64xf32>
    %3 = tpu.matmul %0, %2, %cst {dimension_numbers = #tpu.dot_dimension_numbers<[1], [0], [0], [1], [0, 0, 1, 1], [], []>} : vector<41x576xbf16>, vector<576x64xbf16>, vector<41x64xf32> -> vector<41x64xf32>
    %4 = arith.truncf %3 : vector<41x64xf32> to vector<41x64xbf16>
    %c0_4 = arith.constant 0 : index
    %c0_5 = arith.constant 0 : index
    %5 = vector.load %arg3[%c0_4, %c0_5] : memref<64x1024xbf16, #tpu.memory_space<vmem>>, vector<64x1024xbf16>
    %cst_6 = arith.constant dense<0.000000e+00> : vector<41x1024xf32>
    %6 = tpu.matmul %4, %5, %cst_6 {dimension_numbers = #tpu.dot_dimension_numbers<[1], [0], [0], [1], [0, 0, 1, 1], [], []>} : vector<41x64xbf16>, vector<64x1024xbf16>, vector<41x1024xf32> -> vector<41x1024xf32>
    %c0_7 = arith.constant 0 : index
    %c0_8 = arith.constant 0 : index
    %7 = vector.load %arg4[%c0_7, %c0_8] : memref<41x1xf32, #tpu.memory_space<vmem>>, vector<41x1xf32>
    %8 = vector.broadcast %7 : vector<41x1xf32> to vector<41x1024xf32>
    %9 = arith.addf %6, %8 : vector<41x1024xf32>
    %c0_9 = arith.constant 0 : index
    %c0_10 = arith.constant 0 : index
    %c0_11 = arith.constant 0 : index
    %10 = vector.load %arg5[%c0_9, %c0_10, %c0_11] : memref<1x41x1024xf32, #tpu.memory_space<vmem>>, vector<1x41x1024xf32>
    %11 = vector.shape_cast %10 : vector<1x41x1024xf32> to vector<41x1024xf32>
    %12 = vector.shape_cast %9 : vector<41x1024xf32> to vector<1x41x1024xf32>
    tpu.vector_store %arg5[%c0_9, %c0_10, %c0_11], %12 {strides = array<i32>} : memref<1x41x1024xf32, #tpu.memory_space<vmem>>, vector<1x41x1024xf32>,
    return
  }
  func.func @transform_0(%arg0: i32) -> (i32, i32, i32) {
    %c0_i32 = arith.constant 0 : i32
    %c0_i32_0 = arith.constant 0 : i32
    %c0_i32_1 = arith.constant 0 : i32
    return %arg0, %c0_i32, %c0_i32_0 : i32, i32, i32
  }
  func.func @transform_1(%arg0: i32) -> (i32, i32) {
    %c0_i32 = arith.constant 0 : i32
    %c0_i32_0 = arith.constant 0 : i32
    %c0_i32_1 = arith.constant 0 : i32
    return %c0_i32, %c0_i32_0 : i32, i32
  }
  func.func @transform_2(%arg0: i32) -> (i32, i32) {
    %c0_i32 = arith.constant 0 : i32
    %c0_i32_0 = arith.constant 0 : i32
    %c0_i32_1 = arith.constant 0 : i32
    return %c0_i32, %c0_i32_0 : i32, i32
  }
  func.func @transform_3(%arg0: i32) -> (i32, i32) {
    %c0_i32 = arith.constant 0 : i32
    %c0_i32_0 = arith.constant 0 : i32
    %c0_i32_1 = arith.constant 0 : i32
    return %c0_i32, %c0_i32_0 : i32, i32
  }
  func.func @transform_4(%arg0: i32) -> (i32, i32, i32) {
    %c0_i32 = arith.constant 0 : i32
    %c0_i32_0 = arith.constant 0 : i32
    %c0_i32_1 = arith.constant 0 : i32
    return %arg0, %c0_i32, %c0_i32_0 : i32, i32, i32
  }
}

</mosaic_0001>

<llo_original>
// kernel: seg_seg_forward.1
$region0: #{seg_seg_forward.1}
  #allocation0 [shape = 'u32[]', space=smem, size = 0x4, offset = 0x4, fixed_abs, tag = 'smem constant byte address 0x4 - core index']
  #allocation1 [shape = 'u32[144,128]{1,0:T(1,128)}', space=vmem, size = 0x12000, scoped, tag = 'internal scratch']
  %s0 = inlined_call_operand.vmem [shape: bf16[2,576,64], index: 0, kind: input, shape index: {}]
  %s1 = inlined_call_operand.vmem [shape: bf16[41,576], index: 1, kind: input, shape index: {}]
  %s2 = inlined_call_operand.vmem [shape: bf16[64,1024], index: 2, kind: input, shape index: {}]
  %s3 = inlined_call_operand.vmem [shape: f32[41,1], index: 3, kind: input, shape index: {}]
  %s4 = inlined_call_operand.vmem [shape: f32[2,41,1024], index: 4, kind: output, shape index: {}]
  %s5 = sld [smem:[#allocation0]]
  $region49: #{seg_seg_forward.1} parent=0
    _
  %s7 = ssub.s32 1, %s5
  %s8 = scalar_select 0, %s7, %s5
  loop: start=0, step=1, limit=4
  $region2: #{seg_seg_forward.1} parent=0 // loop_pre_header
    _
  $region3: #{seg_seg_forward.1} parent=0 // loop_header
    %s10 = sphi 0, %s14
    %p11 = scmp.ge.s32.totalorder %s10, 4
    %s20 = sphi 0, %s22
    %s23 = sphi 0, %s20
    %s24 = sphi 0, %s23
    %s40 = sphi 0, %s24
    %s44 = sphi 0, %s44
    %s46 = sphi 0, %s44
    %s47 = sphi 0, %s46
    %s61 = sphi 0, %s47
    %s65 = sphi 0, %s65
    %s67 = sphi 0, %s65
    %s68 = sphi 0, %s67
    %s82 = sphi 0, %s68
    %s86 = sphi 0, %s86
    %s88 = sphi 0, %s86
    %s89 = sphi 0, %s88
    %s103 = sphi 0, %s89
    %s109 = sphi 0, %s111
    %s112 = sphi 0, %s109
    %s113 = sphi 0, %s112
    %s129 = sphi 0, %s113
  $region4: #{seg_seg_forward.1} parent=0 // loop_header_branch
    %13 = sbr.rel (%p11) target = $region8
  $region5: #{seg_seg_forward.1} parent=0 // loop_body
    %s15 = ssub.s32 %s10, 1
    %s16 = ssub.s32 %s10, 2
    %s17 = sadd.s32 %s10, 1
    %s18 = ssub.s32 %s10, %s17
    %p19 = scmp.eq.s32.totalorder %s18, 0
    %s21 = sadd.s32 %s20, 1
    %s22 = scalar_select %p19, %s20, %s21
    %p25 = pneg %p19
    %p26 = scmp.eq.s32.totalorder %s10, 1
    %p27 = por %p25, %p26
    %p28 = scmp.ne.s32.totalorder %s20, %s23
    %p29 = scmp.eq.s32.totalorder %s10, 0
    %p30 = por %p28, %p29
    %p31 = scmp.ne.s32.totalorder %s20, %s23
    %p32 = scmp.eq.s32.totalorder %s15, 1
    %p33 = por %p31, %p32
    %p34 = scmp.ne.s32.totalorder %s23, %s24
    %p35 = scmp.eq.s32.totalorder %s15, 0
    %p36 = por %p34, %p35
    %p37 = scmp.ne.s32.totalorder %s23, %s24
    %p38 = scmp.eq.s32.totalorder %s16, 1
    %p39 = por %p37, %p38
    %p41 = scmp.ne.s32.totalorder %s24, %s40
    %p42 = scmp.eq.s32.totalorder %s16, 0
    %p43 = por %p41, %p42
    %s45 = sadd.s32 %s44, 1
    %p48 = scmp.eq.s32.totalorder %s10, 1
    %p49 = scmp.ne.s32.totalorder %s44, %s46
    %p50 = scmp.eq.s32.totalorder %s10, 0
    %p51 = por %p49, %p50
    %p52 = scmp.ne.s32.totalorder %s44, %s46
    %p53 = scmp.eq.s32.totalorder %s15, 1
    %p54 = por %p52, %p53
    %p55 = scmp.ne.s32.totalorder %s46, %s47
    %p56 = scmp.eq.s32.totalorder %s15, 0
    %p57 = por %p55, %p56
    %p58 = scmp.ne.s32.totalorder %s46, %s47
    %p59 = scmp.eq.s32.totalorder %s16, 1
    %p60 = por %p58, %p59
    %p62 = scmp.ne.s32.totalorder %s47, %s61
    %p63 = scmp.eq.s32.totalorder %s16, 0
    %p64 = por %p62, %p63
    %s66 = sadd.s32 %s65, 1
    %p69 = scmp.eq.s32.totalorder %s10, 1
    %p70 = scmp.ne.s32.totalorder %s65, %s67
    %p71 = scmp.eq.s32.totalorder %s10, 0
    %p72 = por %p70, %p71
    %p73 = scmp.ne.s32.totalorder %s65, %s67
    %p74 = scmp.eq.s32.totalorder %s15, 1
    %p75 = por %p73, %p74
    %p76 = scmp.ne.s32.totalorder %s67, %s68
    %p77 = scmp.eq.s32.totalorder %s15, 0
    %p78 = por %p76, %p77
    %p79 = scmp.ne.s32.totalorder %s67, %s68
    %p80 = scmp.eq.s32.totalorder %s16, 1
    %p81 = por %p79, %p80
    %p83 = scmp.ne.s32.totalorder %s68, %s82
    %p84 = scmp.eq.s32.totalorder %s16, 0
    %p85 = por %p83, %p84
    %s87 = sadd.s32 %s86, 1
    %p90 = scmp.eq.s32.totalorder %s10, 1
    %p91 = scmp.ne.s32.totalorder %s86, %s88
    %p92 = scmp.eq.s32.totalorder %s10, 0
    %p93 = por %p91, %p92
    %p94 = scmp.ne.s32.totalorder %s86, %s88
    %p95 = scmp.eq.s32.totalorder %s15, 1
    %p96 = por %p94, %p95
    %p97 = scmp.ne.s32.totalorder %s88, %s89
    %p98 = scmp.eq.s32.totalorder %s15, 0
    %p99 = por %p97, %p98
    %p100 = scmp.ne.s32.totalorder %s88, %s89
    %p101 = scmp.eq.s32.totalorder %s16, 1
    %p102 = por %p100, %p101
    %p104 = scmp.ne.s32.totalorder %s89, %s103
    %p105 = scmp.eq.s32.totalorder %s16, 0
    %p106 = por %p104, %p105
    %s107 = ssub.s32 %s10, %s17
    %p108 = scmp.eq.s32.totalorder %s107, 0
    %s110 = sadd.s32 %s109, 1
    %s111 = scalar_select %p108, %s109, %s110
    %p114 = pneg %p108
    %p115 = scmp.eq.s32.totalorder %s10, 1
    %p116 = por %p114, %p115
    %p117 = scmp.ne.s32.totalorder %s109, %s112
    %p118 = scmp.eq.s32.totalorder %s10, 0
    %p119 = por %p117, %p118
    %p120 = scmp.ne.s32.totalorder %s109, %s112
    %p121 = scmp.eq.s32.totalorder %s15, 1
    %p122 = por %p120, %p121
    %p123 = scmp.ne.s32.totalorder %s112, %s113
    %p124 = scmp.eq.s32.totalorder %s15, 0
    %p125 = por %p123, %p124
    %p126 = scmp.ne.s32.totalorder %s112, %s113
    %p127 = scmp.eq.s32.totalorder %s16, 1
    %p128 = por %p126, %p127
    %p130 = scmp.ne.s32.totalorder %s113, %s129
    %p131 = scmp.eq.s32.totalorder %s16, 0
    %p132 = por %p130, %p131
    %p133 = scmp.le.s32.totalorder 1, %s10
    %p134 = scmp.lt.s32.totalorder %s10, 3
    %p135 = pnand %p133, %p134
    %p136 = pneg %p135
    // Predicated region
    $region9: #{seg_seg_forward.1} parent=5 // pred_check
      _
    $region10: #{seg_seg_forward.1} parent=5 // pred_check_branch
      %138 = sbr.rel (%p135) target = $region12
    $region11: #{seg_seg_forward.1} parent=5 // pred_region
      %s139 = ssub.s32 %s10, 1
      // Predicated region
      $region13: #{seg_seg_forward.1} parent=11 // pred_check
        %p140 = pneg %p57
      $region14: #{seg_seg_forward.1} parent=11 // pred_check_branch
        %142 = sbr.rel (%p140) target = $region16
      $region15: #{seg_seg_forward.1} parent=11 // pred_region
        _
      $region16: #{seg_seg_forward.1} parent=11 // pred_fallthru
        _
      // Predicated region
      $region17: #{seg_seg_forward.1} parent=11 // pred_check
        %p143 = pneg %p78
      $region18: #{seg_seg_forward.1} parent=11 // pred_check_branch
        %145 = sbr.rel (%p143) target = $region20
      $region19: #{seg_seg_forward.1} parent=11 // pred_region
        _
      $region20: #{seg_seg_forward.1} parent=11 // pred_fallthru
        _
      // Predicated region
      $region21: #{seg_seg_forward.1} parent=11 // pred_check
        %p146 = pneg %p99
      $region22: #{seg_seg_forward.1} parent=11 // pred_check_branch
        %148 = sbr.rel (%p146) target = $region24
      $region23: #{seg_seg_forward.1} parent=11 // pred_region
        _
      $region24: #{seg_seg_forward.1} parent=11 // pred_fallthru
        _
    $region12: #{seg_seg_forward.1} parent=5 // pred_fallthru
      _
    %p149 = scmp.lt.s32.totalorder %s10, 2
    // Predicated region
    $region25: #{seg_seg_forward.1} parent=5 // pred_check
      %p150 = pneg %p149
    $region26: #{seg_seg_forward.1} parent=5 // pred_check_branch
      %152 = sbr.rel (%p150) target = $region28
    $region27: #{seg_seg_forward.1} parent=5 // pred_region
      // Predicated region
      $region29: #{seg_seg_forward.1} parent=27 // pred_check
        %p153 = pneg %p30
      $region30: #{seg_seg_forward.1} parent=27 // pred_check_branch
        %155 = sbr.rel (%p153) target = $region32
      $region31: #{seg_seg_forward.1} parent=27 // pred_region
        %p156 = scmp.lt.s32.totalorder %s10, 1
        %s157 = scalar_select %p156, %s10, 1
        %s158 = smul.addr %s157, 72
        %s159 = smul.addr %s158, 4
        %s160 = scalar_lea.vmem %s0, %s159
      $region32: #{seg_seg_forward.1} parent=27 // pred_fallthru
        _
    $region28: #{seg_seg_forward.1} parent=5 // pred_fallthru
      _
    %p161 = scmp.le.s32.totalorder 1, %s10
    %p162 = scmp.lt.s32.totalorder %s10, 3
    %p163 = pnand %p161, %p162
    %p164 = pneg %p163
    // Predicated region
    $region33: #{seg_seg_forward.1} parent=5 // pred_check
      _
    $region34: #{seg_seg_forward.1} parent=5 // pred_check_branch
      %166 = sbr.rel (%p163) target = $region36
    $region35: #{seg_seg_forward.1} parent=5 // pred_region
      %s167 = ssub.s32 %s10, 1
      %p168 = scmp.lt.s32.totalorder %s15, 1
      %s169 = scalar_select %p168, %s15, 1
      %s170 = smul.addr %s169, 72
      %s171 = smul.addr %s170, 4
      %s172 = scalar_lea.vmem %s0, %s171
      %p173 = pneg %p36
      %p174 = pneg %p33
      %p175 = pneg %p57
      %p176 = pneg %p54
      %p177 = pneg %p78
      %p178 = pneg %p75
      %p179 = pneg %p99
      %p180 = pneg %p96
      %p181 = pneg %p125
      %p182 = pneg %p122
      %p183 = scmp.lt.s32.totalorder %s15, 1
      %s184 = scalar_select %p183, %s15, 1
      %s185 = smul.addr %s184, 48
      %s186 = smul.addr %s185, 8
      %s187 = scalar_lea.vmem %s4, %s186
      %p188 = scmp.lt.s32.totalorder %s15, 1
      %s189 = scalar_select %p188, %s15, 1
      %s190 = smul.addr %s189, 72
      %s191 = smul.addr %s190, 4
      %s192 = scalar_lea.vmem %s0, %s191
      %p193 = scmp.lt.s32.totalorder %s15, 1
      %s194 = scalar_select %p193, %s15, 1
      %s195 = smul.addr %s194, 48
      %s196 = smul.addr %s195, 8
      %s197 = scalar_lea.vmem %s4, %s196
      %v199 = vld [vmem:[%s1] sm:$0xff]
      %v200 = vld [vmem:[%s1 + $0x8] sm:$0xff]
      %v201 = vld [vmem:[%s1 + $0x10] sm:$0xf]
      %v202 = vld [vmem:[%s1 + $0x14] sm:$0xff]
      %v203 = vld [vmem:[%s1 + $0x1c] sm:$0xff]
      %v204 = vld [vmem:[%s1 + $0x24] sm:$0xf]
      %v205 = vld [vmem:[%s1 + $0x28] sm:$0xff]
      %v206 = vld [vmem:[%s1 + $0x30] sm:$0xff]
      %v207 = vld [vmem:[%s1 + $0x38] sm:$0xf]
      %v208 = vld [vmem:[%s1 + $0x3c] sm:$0xff]
      %v209 = vld [vmem:[%s1 + $0x44] sm:$0xff]
      %v210 = vld [vmem:[%s1 + $0x4c] sm:$0xf]
      %v211 = vld [vmem:[%s1 + $0x50] sm:$0xff]
      %v212 = vld [vmem:[%s1 + $0x58] sm:$0xff]
      %v213 = vld [vmem:[%s1 + $0x60] sm:$0xf]
      %v214 = vld [vmem:[%s1 + $0x64] sm:$0x11]
      %v215 = vld [vmem:[%s1 + $0x6c] sm:$0x11]
      %v216 = vld [vmem:[%s1 + $0x74] sm:$0x1]
      %v217 = vld [vmem:[%s192] sm:$0xf]
      %v218 = vld [vmem:[%s192 + $0x4] sm:$0xf]
      %v219 = vld [vmem:[%s192 + $0x8] sm:$0xf]
      %v220 = vld [vmem:[%s192 + $0xc] sm:$0xf]
      %v221 = vld [vmem:[%s192 + $0x10] sm:$0xf]
      %v222 = vld [vmem:[%s192 + $0x14] sm:$0xf]
      %v223 = vld [vmem:[%s192 + $0x18] sm:$0xf]
      %v224 = vld [vmem:[%s192 + $0x1c] sm:$0xf]
      %v225 = vld [vmem:[%s192 + $0x20] sm:$0xf]
      %v226 = vld [vmem:[%s192 + $0x24] sm:$0xf]
      %v227 = vld [vmem:[%s192 + $0x28] sm:$0xf]
      %v228 = vld [vmem:[%s192 + $0x2c] sm:$0xf]
      %v229 = vld [vmem:[%s192 + $0x30] sm:$0xf]
      %v230 = vld [vmem:[%s192 + $0x34] sm:$0xf]
      %v231 = vld [vmem:[%s192 + $0x38] sm:$0xf]
      %v232 = vld [vmem:[%s192 + $0x3c] sm:$0xf]
      %v233 = vld [vmem:[%s192 + $0x40] sm:$0xf]
      %v234 = vld [vmem:[%s192 + $0x44] sm:$0xf]
      %v235 = vld [vmem:[%s192 + $0x48] sm:$0xf]
      %v236 = vld [vmem:[%s192 + $0x4c] sm:$0xf]
      %v237 = vld [vmem:[%s192 + $0x50] sm:$0xf]
      %v238 = vld [vmem:[%s192 + $0x54] sm:$0xf]
      %v239 = vld [vmem:[%s192 + $0x58] sm:$0xf]
      %v240 = vld [vmem:[%s192 + $0x5c] sm:$0xf]
      %v241 = vld [vmem:[%s192 + $0x60] sm:$0xf]
      %v242 = vld [vmem:[%s192 + $0x64] sm:$0xf]
      %v243 = vld [vmem:[%s192 + $0x68] sm:$0xf]
      %v244 = vld [vmem:[%s192 + $0x6c] sm:$0xf]
      %v245 = vld [vmem:[%s192 + $0x70] sm:$0xf]
      %v246 = vld [vmem:[%s192 + $0x74] sm:$0xf]
      %v247 = vld [vmem:[%s192 + $0x78] sm:$0xf]
      %v248 = vld [vmem:[%s192 + $0x7c] sm:$0xf]
      %v249 = vld [vmem:[%s192 + $0x80] sm:$0xf]
      %v250 = vld [vmem:[%s192 + $0x84] sm:$0xf]
      %v251 = vld [vmem:[%s192 + $0x88] sm:$0xf]
      %v252 = vld [vmem:[%s192 + $0x8c] sm:$0xf]
      %v253 = vld [vmem:[%s192 + $0x90] sm:$0xf]
      %v254 = vld [vmem:[%s192 + $0x94] sm:$0xf]
      %v255 = vld [vmem:[%s192 + $0x98] sm:$0xf]
      %v256 = vld [vmem:[%s192 + $0x9c] sm:$0xf]
      %v257 = vld [vmem:[%s192 + $0xa0] sm:$0xf]
      %v258 = vld [vmem:[%s192 + $0xa4] sm:$0xf]
      %v259 = vld [vmem:[%s192 + $0xa8] sm:$0xf]
      %v260 = vld [vmem:[%s192 + $0xac] sm:$0xf]
      %v261 = vld [vmem:[%s192 + $0xb0] sm:$0xf]
      %v262 = vld [vmem:[%s192 + $0xb4] sm:$0xf]
      %v263 = vld [vmem:[%s192 + $0xb8] sm:$0xf]
      %v264 = vld [vmem:[%s192 + $0xbc] sm:$0xf]
      %v265 = vld [vmem:[%s192 + $0xc0] sm:$0xf]
      %v266 = vld [vmem:[%s192 + $0xc4] sm:$0xf]
      %v267 = vld [vmem:[%s192 + $0xc8] sm:$0xf]
      %v268 = vld [vmem:[%s192 + $0xcc] sm:$0xf]
      %v269 = vld [vmem:[%s192 + $0xd0] sm:$0xf]
      %v270 = vld [vmem:[%s192 + $0xd4] sm:$0xf]
      %v271 = vld [vmem:[%s192 + $0xd8] sm:$0xf]
      %v272 = vld [vmem:[%s192 + $0xdc] sm:$0xf]
      %v273 = vld [vmem:[%s192 + $0xe0] sm:$0xf]
      %v274 = vld [vmem:[%s192 + $0xe4] sm:$0xf]
      %v275 = vld [vmem:[%s192 + $0xe8] sm:$0xf]
      %v276 = vld [vmem:[%s192 + $0xec] sm:$0xf]
      %v277 = vld [vmem:[%s192 + $0xf0] sm:$0xf]
      %v278 = vld [vmem:[%s192 + $0xf4] sm:$0xf]
      %v279 = vld [vmem:[%s192 + $0xf8] sm:$0xf]
      %v280 = vld [vmem:[%s192 + $0xfc] sm:$0xf]
      %v281 = vld [vmem:[%s192 + $0x100] sm:$0xf]
      %v282 = vld [vmem:[%s192 + $0x104] sm:$0xf]
      %v283 = vld [vmem:[%s192 + $0x108] sm:$0xf]
      %v284 = vld [vmem:[%s192 + $0x10c] sm:$0xf]
      %v285 = vld [vmem:[%s192 + $0x110] sm:$0xf]
      %v286 = vld [vmem:[%s192 + $0x114] sm:$0xf]
      %v287 = vld [vmem:[%s192 + $0x118] sm:$0xf]
      %v288 = vld [vmem:[%s192 + $0x11c] sm:$0xf]
      %v307 = vunpack.c.l.b16 %v199
      %v308 = vunpack.c.h.b16 %v199
      %v309 = vunpack.c.l.b16 %v200
      %v310 = vunpack.c.h.b16 %v200
      %v311 = vunpack.c.l.b16 %v201
      %v312 = vunpack.c.l.b16 %v202
      %v313 = vunpack.c.h.b16 %v202
      %v314 = vunpack.c.l.b16 %v203
      %v315 = vunpack.c.h.b16 %v203
      %v316 = vunpack.c.l.b16 %v204
      %v317 = vunpack.c.l.b16 %v205
      %v318 = vunpack.c.h.b16 %v205
      %v319 = vunpack.c.l.b16 %v206
      %v320 = vunpack.c.h.b16 %v206
      %v321 = vunpack.c.l.b16 %v207
      %v322 = vunpack.c.l.b16 %v208
      %v323 = vunpack.c.h.b16 %v208
      %v324 = vunpack.c.l.b16 %v209
      %v325 = vunpack.c.h.b16 %v209
      %v326 = vunpack.c.l.b16 %v210
      %v327 = vunpack.c.l.b16 %v211
      %v328 = vunpack.c.h.b16 %v211
      %v329 = vunpack.c.l.b16 %v212
      %v330 = vunpack.c.h.b16 %v212
      %v331 = vunpack.c.l.b16 %v213
      %v332 = vunpack.c.l.b16 %v214
      %v333 = vunpack.c.h.b16 %v214
      %v334 = vunpack.c.l.b16 %v215
      %v335 = vunpack.c.h.b16 %v215
      %v336 = vunpack.c.l.b16 %v216
      %v337 = vpack.c.b16 %v312, %v307
      %v338 = vpack.c.b16 %v313, %v308
      %v339 = vpack.c.b16 %v314, %v309
      %v340 = vpack.c.b16 %v315, %v310
      %v341 = vpack.c.b16 %v316, %v311
      %v342 = vpack.c.b16 %v322, %v317
      %v343 = vpack.c.b16 %v323, %v318
      %v344 = vpack.c.b16 %v324, %v319
      %v345 = vpack.c.b16 %v325, %v320
      %v346 = vpack.c.b16 %v326, %v321
      %v347 = vpack.c.b16 %v332, %v327
      %v348 = vpack.c.b16 %v333, %v328
      %v349 = vpack.c.b16 %v334, %v329
      %v350 = vpack.c.b16 %v335, %v330
      %v351 = vpack.c.b16 %v336, %v331
      %v436 = vunpack.c.l.b16 %v217
      %v437 = vunpack.c.l.b16 %v218
      %v438 = vunpack.c.l.b16 %v219
      %v439 = vunpack.c.l.b16 %v220
      %v440 = vunpack.c.l.b16 %v221
      %v441 = vunpack.c.l.b16 %v222
      %v442 = vunpack.c.l.b16 %v223
      %v443 = vunpack.c.l.b16 %v224
      %v444 = vunpack.c.l.b16 %v225
      %v445 = vunpack.c.l.b16 %v226
      %v446 = vunpack.c.l.b16 %v227
      %v447 = vunpack.c.l.b16 %v228
      %v448 = vunpack.c.l.b16 %v229
      %v449 = vunpack.c.l.b16 %v230
      %v450 = vunpack.c.l.b16 %v231
      %v451 = vunpack.c.l.b16 %v232
      %v452 = vunpack.c.l.b16 %v233
      %v453 = vunpack.c.l.b16 %v234
      %v454 = vunpack.c.l.b16 %v235
      %v455 = vunpack.c.l.b16 %v236
      %v456 = vunpack.c.l.b16 %v237
      %v457 = vunpack.c.l.b16 %v238
      %v458 = vunpack.c.l.b16 %v239
      %v459 = vunpack.c.l.b16 %v240
      %v460 = vunpack.c.l.b16 %v241
      %v461 = vunpack.c.l.b16 %v242
      %v462 = vunpack.c.l.b16 %v243
      %v463 = vunpack.c.l.b16 %v244
      %v464 = vunpack.c.l.b16 %v245
      %v465 = vunpack.c.l.b16 %v246
      %v466 = vunpack.c.l.b16 %v247
      %v467 = vunpack.c.l.b16 %v248
      %v468 = vunpack.c.l.b16 %v249
      %v469 = vunpack.c.l.b16 %v250
      %v470 = vunpack.c.l.b16 %v251
      %v471 = vunpack.c.l.b16 %v252
      %v472 = vunpack.c.l.b16 %v253
      %v473 = vunpack.c.l.b16 %v254
      %v474 = vunpack.c.l.b16 %v255
      %v475 = vunpack.c.l.b16 %v256
      %v476 = vunpack.c.l.b16 %v257
      %v477 = vunpack.c.l.b16 %v258
      %v478 = vunpack.c.l.b16 %v259
      %v479 = vunpack.c.l.b16 %v260
      %v480 = vunpack.c.l.b16 %v261
      %v481 = vunpack.c.l.b16 %v262
      %v482 = vunpack.c.l.b16 %v263
      %v483 = vunpack.c.l.b16 %v264
      %v484 = vunpack.c.l.b16 %v265
      %v485 = vunpack.c.l.b16 %v266
      %v486 = vunpack.c.l.b16 %v267
      %v487 = vunpack.c.l.b16 %v268
      %v488 = vunpack.c.l.b16 %v269
      %v489 = vunpack.c.l.b16 %v270
      %v490 = vunpack.c.l.b16 %v271
      %v491 = vunpack.c.l.b16 %v272
      %v492 = vunpack.c.l.b16 %v273
      %v493 = vunpack.c.l.b16 %v274
      %v494 = vunpack.c.l.b16 %v275
      %v495 = vunpack.c.l.b16 %v276
      %v496 = vunpack.c.l.b16 %v277
      %v497 = vunpack.c.l.b16 %v278
      %v498 = vunpack.c.l.b16 %v279
      %v499 = vunpack.c.l.b16 %v280
      %v500 = vunpack.c.l.b16 %v281
      %v501 = vunpack.c.l.b16 %v282
      %v502 = vunpack.c.l.b16 %v283
      %v503 = vunpack.c.l.b16 %v284
      %v504 = vunpack.c.l.b16 %v285
      %v505 = vunpack.c.l.b16 %v286
      %v506 = vunpack.c.l.b16 %v287
      %v507 = vunpack.c.l.b16 %v288
      %v508 = vpack.c.b16 %v437, %v436
      %v509 = vpack.c.b16 %v439, %v438
      %v510 = vpack.c.b16 %v441, %v440
      %v511 = vpack.c.b16 %v443, %v442
      %v512 = vpack.c.b16 %v445, %v444
      %v513 = vpack.c.b16 %v447, %v446
      %v514 = vpack.c.b16 %v449, %v448
      %v515 = vpack.c.b16 %v451, %v450
      %v516 = vpack.c.b16 %v453, %v452
      %v517 = vpack.c.b16 %v455, %v454
      %v518 = vpack.c.b16 %v457, %v456
      %v519 = vpack.c.b16 %v459, %v458
      %v520 = vpack.c.b16 %v461, %v460
      %v521 = vpack.c.b16 %v463, %v462
      %v522 = vpack.c.b16 %v465, %v464
      %v523 = vpack.c.b16 %v467, %v466
      %v524 = vpack.c.b16 %v469, %v468
      %v525 = vpack.c.b16 %v471, %v470
      %v526 = vpack.c.b16 %v473, %v472
      %v527 = vpack.c.b16 %v475, %v474
      %v528 = vpack.c.b16 %v477, %v476
      %v529 = vpack.c.b16 %v479, %v478
      %v530 = vpack.c.b16 %v481, %v480
      %v531 = vpack.c.b16 %v483, %v482
      %v532 = vpack.c.b16 %v485, %v484
      %v533 = vpack.c.b16 %v487, %v486
      %v534 = vpack.c.b16 %v489, %v488
      %v535 = vpack.c.b16 %v491, %v490
      %v536 = vpack.c.b16 %v493, %v492
      %v537 = vpack.c.b16 %v495, %v494
      %v538 = vpack.c.b16 %v497, %v496
      %v539 = vpack.c.b16 %v499, %v498
      %v540 = vpack.c.b16 %v501, %v500
      %v541 = vpack.c.b16 %v503, %v502
      %v542 = vpack.c.b16 %v505, %v504
      %v543 = vpack.c.b16 %v507, %v506
      %vm580 = vcmask 523264
      %v582 = vsel %vm580, %v341, 0
      %v585 = vsel %vm580, %v346, 0
      %v588 = vsel %vm580, %v351, 0
      %590 = vmatprep.subr.bf16.mxu0 0
      %591 = vmatpush1.bf16.msra.mxu0 %v508
      %592 = vmatprep.subr.bf16.mxu0 0
      %593 = vmatpush1.bf16.msra.mxu0 %v509
      %594 = vmatprep.subr.bf16.mxu0 0
      %595 = vmatpush1.bf16.msra.mxu0 %v510
      %596 = vmatprep.subr.bf16.mxu0 0
      %597 = vmatpush1.bf16.msra.mxu0 %v511
      %598 = vmatprep.subr.bf16.mxu0 0
      %599 = vmatpush1.bf16.msra.mxu0 %v512
      %600 = vmatprep.subr.bf16.mxu0 0
      %601 = vmatpush1.bf16.msra.mxu0 %v513
      %602 = vmatprep.subr.bf16.mxu0 0
      %603 = vmatpush1.bf16.msra.mxu0 %v514
      %604 = vmatprep.subr.bf16.mxu0 0
      %605 = vmatpush1.bf16.msra.mxu0 %v515
      %606 = vmatprep.subr.bf16.mxu0 0
      %607 = vmatpush1.bf16.msra.mxu0 %v516
      %608 = vmatprep.subr.bf16.mxu0 0
      %609 = vmatpush1.bf16.msra.mxu0 %v517
      %610 = vmatprep.subr.bf16.mxu0 0
      %611 = vmatpush1.bf16.msra.mxu0 %v518
      %612 = vmatprep.subr.bf16.mxu0 0
      %613 = vmatpush1.bf16.msra.mxu0 %v519
      %614 = vmatprep.subr.bf16.mxu0 0
      %615 = vmatpush1.bf16.msra.mxu0 %v520
      %616 = vmatprep.subr.bf16.mxu0 0
      %617 = vmatpush1.bf16.msra.mxu0 %v521
      %618 = vmatprep.subr.bf16.mxu0 0
      %619 = vmatpush1.bf16.msra.mxu0 %v522
      %620 = vmatprep.subr.bf16.mxu0 0
      %621 = vmatpush1.bf16.msra.mxu0 %v523
      %622 = vmatprep.mubr.bf16.mxu0 %v338
      %623 = vmatmul.mubr.bf16.gmra.mrb[0].mxu0 %v337
      %v624 = vpop.f32.mrb[0].mxu0
      %v625 = vadd.f32 0.0, %v624
      %v626 = vpop.f32.mrb[0].mxu0
      %v627 = vpop.f32.mrb[0].mxu0
      %v628 = vadd.f32 0.0, %v627
      %v629 = vpop.f32.mrb[0].mxu0
      %630 = vmatprep.mubr.bf16.mxu0 %v343
      %631 = vmatmul.mubr.bf16.gmra.mrb[0].mxu0 %v342
      %v632 = vpop.f32.mrb[0].mxu0
      %v633 = vadd.f32 0.0, %v632
      %v634 = vpop.f32.mrb[0].mxu0
      %v635 = vpop.f32.mrb[0].mxu0
      %v636 = vadd.f32 0.0, %v635
      %v637 = vpop.f32.mrb[0].mxu0
      %638 = vmatprep.mubr.bf16.mxu0 %v348
      %639 = vmatmul.mubr.bf16.gmra.mrb[0].mxu0 %v347
      %v640 = vpop.f32.mrb[0].mxu0
      %v641 = vadd.f32 0.0, %v640
      %v642 = vpop.f32.mrb[0].mxu0
      %v643 = vpop.f32.mrb[0].mxu0
      %v644 = vadd.f32 0.0, %v643
      %v645 = vpop.f32.mrb[0].mxu0
      %646 = vdwg.mxu0
      %647 = vmatprep.subr.bf16.mxu0 0
      %648 = vmatpush1.bf16.msra.mxu0 %v524
      %649 = vmatprep.subr.bf16.mxu0 0
      %650 = vmatpush1.bf16.msra.mxu0 %v525
      %651 = vmatprep.subr.bf16.mxu0 0
      %652 = vmatpush1.bf16.msra.mxu0 %v526
      %653 = vmatprep.subr.bf16.mxu0 0
      %654 = vmatpush1.bf16.msra.mxu0 %v527
      %655 = vmatprep.subr.bf16.mxu0 0
      %656 = vmatpush1.bf16.msra.mxu0 %v528
      %657 = vmatprep.subr.bf16.mxu0 0
      %658 = vmatpush1.bf16.msra.mxu0 %v529
      %659 = vmatprep.subr.bf16.mxu0 0
      %660 = vmatpush1.bf16.msra.mxu0 %v530
      %661 = vmatprep.subr.bf16.mxu0 0
      %662 = vmatpush1.bf16.msra.mxu0 %v531
      %663 = vmatprep.subr.bf16.mxu0 0
      %664 = vmatpush1.bf16.msra.mxu0 %v532
      %665 = vmatprep.subr.bf16.mxu0 0
      %666 = vmatpush1.bf16.msra.mxu0 %v533
      %667 = vmatprep.subr.bf16.mxu0 0
      %668 = vmatpush1.bf16.msra.mxu0 %v534
      %669 = vmatprep.subr.bf16.mxu0 0
      %670 = vmatpush1.bf16.msra.mxu0 %v535
      %671 = vmatprep.subr.bf16.mxu0 0
      %672 = vmatpush1.bf16.msra.mxu0 %v536
      %673 = vmatprep.subr.bf16.mxu0 0
      %674 = vmatpush1.bf16.msra.mxu0 %v537
      %675 = vmatprep.subr.bf16.mxu0 0
      %676 = vmatpush1.bf16.msra.mxu0 %v538
      %677 = vmatprep.subr.bf16.mxu0 0
      %678 = vmatpush1.bf16.msra.mxu0 %v539
      %679 = vmatprep.mubr.bf16.mxu0 %v340
      %680 = vmatmul.mubr.bf16.gmra.mrb[0].mxu0 %v339
      %v681 = vpop.f32.mrb[0].mxu0
      %v682 = vadd.f32 %v625, %v681
      %v683 = vpop.f32.mrb[0].mxu0
      %v684 = vpop.f32.mrb[0].mxu0
      %v685 = vadd.f32 %v628, %v684
      %v686 = vpop.f32.mrb[0].mxu0
      %687 = vmatprep.mubr.bf16.mxu0 %v345
      %688 = vmatmul.mubr.bf16.gmra.mrb[0].mxu0 %v344
      %v689 = vpop.f32.mrb[0].mxu0
      %v690 = vadd.f32 %v633, %v689
      %v691 = vpop.f32.mrb[0].mxu0
      %v692 = vpop.f32.mrb[0].mxu0
      %v693 = vadd.f32 %v636, %v692
      %v694 = vpop.f32.mrb[0].mxu0
      %695 = vmatprep.mubr.bf16.mxu0 %v350
      %696 = vmatmul.mubr.bf16.gmra.mrb[0].mxu0 %v349
      %v697 = vpop.f32.mrb[0].mxu0
      %v698 = vadd.f32 %v641, %v697
      %v699 = vpop.f32.mrb[0].mxu0
      %v700 = vpop.f32.mrb[0].mxu0
      %v701 = vadd.f32 %v644, %v700
      %v702 = vpop.f32.mrb[0].mxu0
      %703 = vdwg.mxu0
      %704 = vmatprep.subr.bf16.mxu0 0
      %705 = vmatpush1.bf16.msra.mxu0 %v540
      %706 = vmatprep.subr.bf16.mxu0 0
      %707 = vmatpush1.bf16.msra.mxu0 %v541
      %708 = vmatprep.subr.bf16.mxu0 0
      %709 = vmatpush1.bf16.msra.mxu0 %v542
      %710 = vmatprep.subr.bf16.mxu0 0
      %711 = vmatpush1.bf16.msra.mxu0 %v543
      %712 = vmatprep.subr.bf16.mxu0 0
      %713 = vmatpush1.bf16.msra.mxu0 0
      %714 = vmatprep.subr.bf16.mxu0 0
      %715 = vmatpush1.bf16.msra.mxu0 0
      %716 = vmatprep.subr.bf16.mxu0 0
      %717 = vmatpush1.bf16.msra.mxu0 0
      %718 = vmatprep.subr.bf16.mxu0 0
      %719 = vmatpush1.bf16.msra.mxu0 0
      %720 = vmatprep.subr.bf16.mxu0 0
      %721 = vmatpush1.bf16.msra.mxu0 0
      %722 = vmatprep.subr.bf16.mxu0 0
      %723 = vmatpush1.bf16.msra.mxu0 0
      %724 = vmatprep.subr.bf16.mxu0 0
      %725 = vmatpush1.bf16.msra.mxu0 0
      %726 = vmatprep.subr.bf16.mxu0 0
      %727 = vmatpush1.bf16.msra.mxu0 0
      %728 = vmatprep.subr.bf16.mxu0 0
      %729 = vmatpush1.bf16.msra.mxu0 0
      %730 = vmatprep.subr.bf16.mxu0 0
      %731 = vmatpush1.bf16.msra.mxu0 0
      %732 = vmatprep.subr.bf16.mxu0 0
      %733 = vmatpush1.bf16.msra.mxu0 0
      %734 = vmatprep.subr.bf16.mxu0 0
      %735 = vmatpush1.bf16.msra.mxu0 0
      %736 = vmatprep.mubr.bf16.mxu0 0
      %737 = vmatmul.mubr.bf16.gmra.mrb[0].mxu0 %v582
      %v738 = vpop.f32.mrb[0].mxu0
      %v739 = vadd.f32 %v682, %v738
      %v740 = vpop.f32.mrb[0].mxu0
      %v741 = vpop.f32.mrb[0].mxu0
      %v742 = vadd.f32 %v685, %v741
      %v743 = vpop.f32.mrb[0].mxu0
      %744 = vmatprep.mubr.bf16.mxu0 0
      %745 = vmatmul.mubr.bf16.gmra.mrb[0].mxu0 %v585
      %v746 = vpop.f32.mrb[0].mxu0
      %v747 = vadd.f32 %v690, %v746
      %v748 = vpop.f32.mrb[0].mxu0
      %v749 = vpop.f32.mrb[0].mxu0
      %v750 = vadd.f32 %v693, %v749
      %v751 = vpop.f32.mrb[0].mxu0
      %752 = vmatprep.mubr.bf16.mxu0 0
      %753 = vmatmul.mubr.bf16.gmra.mrb[0].mxu0 %v588
      %v754 = vpop.f32.mrb[0].mxu0
      %v755 = vadd.f32 %v698, %v754
      %v756 = vpop.f32.mrb[0].mxu0
      %v757 = vpop.f32.mrb[0].mxu0
      %v758 = vadd.f32 %v701, %v757
      %v759 = vpop.f32.mrb[0].mxu0
      %760 = vdwg.mxu0
      %v761 = vpack.c.bf16 %v742, %v739
      %v762 = vpack.c.bf16 %v750, %v747
      %v763 = vpack.c.bf16 %v758, %v755
      %v764 = vld [vmem:[%s2] sm:$0xff]
      %v765 = vld [vmem:[%s2 + $0x8] sm:$0xff]
      %v766 = vld [vmem:[%s2 + $0x10] sm:$0xff]
      %v767 = vld [vmem:[%s2 + $0x18] sm:$0xff]
      %v768 = vld [vmem:[%s2 + $0x20] sm:$0xff]
      %v769 = vld [vmem:[%s2 + $0x28] sm:$0xff]
      %v770 = vld [vmem:[%s2 + $0x30] sm:$0xff]
      %v771 = vld [vmem:[%s2 + $0x38] sm:$0xff]
      %v772 = vld [vmem:[%s2 + $0x40] sm:$0xff]
      %v773 = vld [vmem:[%s2 + $0x48] sm:$0xff]
      %v774 = vld [vmem:[%s2 + $0x50] sm:$0xff]
      %v775 = vld [vmem:[%s2 + $0x58] sm:$0xff]
      %v776 = vld [vmem:[%s2 + $0x60] sm:$0xff]
      %v777 = vld [vmem:[%s2 + $0x68] sm:$0xff]
      %v778 = vld [vmem:[%s2 + $0x70] sm:$0xff]
      %v779 = vld [vmem:[%s2 + $0x78] sm:$0xff]
      %v780 = vld [vmem:[%s2 + $0x80] sm:$0xff]
      %v781 = vld [vmem:[%s2 + $0x88] sm:$0xff]
      %v782 = vld [vmem:[%s2 + $0x90] sm:$0xff]
      %v783 = vld [vmem:[%s2 + $0x98] sm:$0xff]
      %v784 = vld [vmem:[%s2 + $0xa0] sm:$0xff]
      %v785 = vld [vmem:[%s2 + $0xa8] sm:$0xff]
      %v786 = vld [vmem:[%s2 + $0xb0] sm:$0xff]
      %v787 = vld [vmem:[%s2 + $0xb8] sm:$0xff]
      %v788 = vld [vmem:[%s2 + $0xc0] sm:$0xff]
      %v789 = vld [vmem:[%s2 + $0xc8] sm:$0xff]
      %v790 = vld [vmem:[%s2 + $0xd0] sm:$0xff]
      %v791 = vld [vmem:[%s2 + $0xd8] sm:$0xff]
      %v792 = vld [vmem:[%s2 + $0xe0] sm:$0xff]
      %v793 = vld [vmem:[%s2 + $0xe8] sm:$0xff]
      %v794 = vld [vmem:[%s2 + $0xf0] sm:$0xff]
      %v795 = vld [vmem:[%s2 + $0xf8] sm:$0xff]
      %v796 = vld [vmem:[%s3] sm:$0xff]
      %v797 = vld [vmem:[%s3 + $0x8] sm:$0xff]
      %v798 = vld [vmem:[%s3 + $0x10] sm:$0xff]
      %v799 = vld [vmem:[%s3 + $0x18] sm:$0xff]
      %v800 = vld [vmem:[%s3 + $0x20] sm:$0xff]
      %v801 = vld [vmem:[%s3 + $0x28] sm:$0x1]
      %803 = vset.pattern.permute.xlu0 0
      %804 = vperm.xlu0 %803, %v796
      %v805 = vpop.permute.xlu0 %804
      %808 = vset.pattern.permute.xlu0 0
      %809 = vperm.xlu0 %808, %v797
      %v810 = vpop.permute.xlu0 %809
      %813 = vset.pattern.permute.xlu0 0
      %814 = vperm.xlu0 %813, %v798
      %v815 = vpop.permute.xlu0 %814
      %818 = vset.pattern.permute.xlu0 0
      %819 = vperm.xlu0 %818, %v799
      %v820 = vpop.permute.xlu0 %819
      %823 = vset.pattern.permute.xlu0 0
      %824 = vperm.xlu0 %823, %v800
      %v825 = vpop.permute.xlu0 %824
      %828 = vset.pattern.permute.xlu0 0
      %829 = vperm.xlu0 %828, %v801
      %v830 = vpop.permute.xlu0 %829
      %v864 = vunpack.c.l.b16 %v764
      %v865 = vunpack.c.h.b16 %v764
      %v866 = vunpack.c.l.b16 %v765
      %v867 = vunpack.c.h.b16 %v765
      %v868 = vunpack.c.l.b16 %v766
      %v869 = vunpack.c.h.b16 %v766
      %v870 = vunpack.c.l.b16 %v767
      %v871 = vunpack.c.h.b16 %v767
      %v872 = vunpack.c.l.b16 %v768
      %v873 = vunpack.c.h.b16 %v768
      %v874 = vunpack.c.l.b16 %v769
      %v875 = vunpack.c.h.b16 %v769
      %v876 = vunpack.c.l.b16 %v770
      %v877 = vunpack.c.h.b16 %v770
      %v878 = vunpack.c.l.b16 %v771
      %v879 = vunpack.c.h.b16 %v771
      %v880 = vunpack.c.l.b16 %v772
      %v881 = vunpack.c.h.b16 %v772
      %v882 = vunpack.c.l.b16 %v773
      %v883 = vunpack.c.h.b16 %v773
      %v884 = vunpack.c.l.b16 %v774
      %v885 = vunpack.c.h.b16 %v774
      %v886 = vunpack.c.l.b16 %v775
      %v887 = vunpack.c.h.b16 %v775
      %v888 = vunpack.c.l.b16 %v776
      %v889 = vunpack.c.h.b16 %v776
      %v890 = vunpack.c.l.b16 %v777
      %v891 = vunpack.c.h.b16 %v777
      %v892 = vunpack.c.l.b16 %v778
      %v893 = vunpack.c.h.b16 %v778
      %v894 = vunpack.c.l.b16 %v779
      %v895 = vunpack.c.h.b16 %v779
      %v896 = vunpack.c.l.b16 %v780
      %v897 = vunpack.c.h.b16 %v780
      %v898 = vunpack.c.l.b16 %v781
      %v899 = vunpack.c.h.b16 %v781
      %v900 = vunpack.c.l.b16 %v782
      %v901 = vunpack.c.h.b16 %v782
      %v902 = vunpack.c.l.b16 %v783
      %v903 = vunpack.c.h.b16 %v783
      %v904 = vunpack.c.l.b16 %v784
      %v905 = vunpack.c.h.b16 %v784
      %v906 = vunpack.c.l.b16 %v785
      %v907 = vunpack.c.h.b16 %v785
      %v908 = vunpack.c.l.b16 %v786
      %v909 = vunpack.c.h.b16 %v786
      %v910 = vunpack.c.l.b16 %v787
      %v911 = vunpack.c.h.b16 %v787
      %v912 = vunpack.c.l.b16 %v788
      %v913 = vunpack.c.h.b16 %v788
      %v914 = vunpack.c.l.b16 %v789
      %v915 = vunpack.c.h.b16 %v789
      %v916 = vunpack.c.l.b16 %v790
      %v917 = vunpack.c.h.b16 %v790
      %v918 = vunpack.c.l.b16 %v791
      %v919 = vunpack.c.h.b16 %v791
      %v920 = vunpack.c.l.b16 %v792
      %v921 = vunpack.c.h.b16 %v792
      %v922 = vunpack.c.l.b16 %v793
      %v923 = vunpack.c.h.b16 %v793
      %v924 = vunpack.c.l.b16 %v794
      %v925 = vunpack.c.h.b16 %v794
      %v926 = vunpack.c.l.b16 %v795
      %v927 = vunpack.c.h.b16 %v795
      %v928 = vpack.c.b16 %v872, %v864
      %v929 = vpack.c.b16 %v873, %v865
      %v930 = vpack.c.b16 %v874, %v866
      %v931 = vpack.c.b16 %v875, %v867
      %v932 = vpack.c.b16 %v876, %v868
      %v933 = vpack.c.b16 %v877, %v869
      %v934 = vpack.c.b16 %v878, %v870
      %v935 = vpack.c.b16 %v879, %v871
      %v936 = vpack.c.b16 %v888, %v880
      %v937 = vpack.c.b16 %v889, %v881
      %v938 = vpack.c.b16 %v890, %v882
      %v939 = vpack.c.b16 %v891, %v883
      %v940 = vpack.c.b16 %v892, %v884
      %v941 = vpack.c.b16 %v893, %v885
      %v942 = vpack.c.b16 %v894, %v886
      %v943 = vpack.c.b16 %v895, %v887
      %v944 = vpack.c.b16 %v904, %v896
      %v945 = vpack.c.b16 %v905, %v897
      %v946 = vpack.c.b16 %v906, %v898
      %v947 = vpack.c.b16 %v907, %v899
      %v948 = vpack.c.b16 %v908, %v900
      %v949 = vpack.c.b16 %v909, %v901
      %v950 = vpack.c.b16 %v910, %v902
      %v951 = vpack.c.b16 %v911, %v903
      %v952 = vpack.c.b16 %v920, %v912
      %v953 = vpack.c.b16 %v921, %v913
      %v954 = vpack.c.b16 %v922, %v914
      %v955 = vpack.c.b16 %v923, %v915
      %v956 = vpack.c.b16 %v924, %v916
      %v957 = vpack.c.b16 %v925, %v917
      %v958 = vpack.c.b16 %v926, %v918
      %v959 = vpack.c.b16 %v927, %v919
      %v993 = vsel %vm580, %v761, 0
      %v996 = vsel %vm580, %v762, 0
      %v999 = vsel %vm580, %v763, 0
      %1001 = vmatprep.subr.bf16.mxu0 %v929
      %1002 = vmatpush1.bf16.msra.mxu0 %v928
      %1003 = vmatprep.subr.bf16.mxu0 %v937
      %1004 = vmatpush1.bf16.msra.mxu0 %v936
      %1005 = vmatprep.subr.bf16.mxu0 %v945
      %1006 = vmatpush1.bf16.msra.mxu0 %v944
      %1007 = vmatprep.subr.bf16.mxu0 %v953
      %1008 = vmatpush1.bf16.msra.mxu0 %v952
      %1009 = vmatprep.subr.bf16.mxu0 0
      %1010 = vmatpush1.bf16.msra.mxu0 0
      %1011 = vmatprep.subr.bf16.mxu0 0
      %1012 = vmatpush1.bf16.msra.mxu0 0
      %1013 = vmatprep.subr.bf16.mxu0 0
      %1014 = vmatpush1.bf16.msra.mxu0 0
      %1015 = vmatprep.subr.bf16.mxu0 0
      %1016 = vmatpush1.bf16.msra.mxu0 0
      %1017 = vmatprep.subr.bf16.mxu0 0
      %1018 = vmatpush1.bf16.msra.mxu0 0
      %1019 = vmatprep.subr.bf16.mxu0 0
      %1020 = vmatpush1.bf16.msra.mxu0 0
      %1021 = vmatprep.subr.bf16.mxu0 0
      %1022 = vmatpush1.bf16.msra.mxu0 0
      %1023 = vmatprep.subr.bf16.mxu0 0
      %1024 = vmatpush1.bf16.msra.mxu0 0
      %1025 = vmatprep.subr.bf16.mxu0 0
      %1026 = vmatpush1.bf16.msra.mxu0 0
      %1027 = vmatprep.subr.bf16.mxu0 0
      %1028 = vmatpush1.bf16.msra.mxu0 0
      %1029 = vmatprep.subr.bf16.mxu0 0
      %1030 = vmatpush1.bf16.msra.mxu0 0
      %1031 = vmatprep.subr.bf16.mxu0 0
      %1032 = vmatpush1.bf16.msra.mxu0 0
      %1033 = vmatprep.mubr.bf16.mxu0 0
      %1034 = vmatmul.mubr.bf16.gmra.mrb[0].mxu0 %v993
      %v1035 = vpop.f32.mrb[0].mxu0
      %v1036 = vadd.f32 %v805, %v1035
      %v1037 = vpop.f32.mrb[0].mxu0
      %v1038 = vadd.f32 %v805, %v1037
      %v1039 = vpop.f32.mrb[0].mxu0
      %v1040 = vadd.f32 %v810, %v1039
      %v1041 = vpop.f32.mrb[0].mxu0
      %v1042 = vadd.f32 %v810, %v1041
      %1043 = vmatprep.mubr.bf16.mxu0 0
      %1044 = vmatmul.mubr.bf16.gmra.mrb[0].mxu0 %v996
      %v1045 = vpop.f32.mrb[0].mxu0
      %v1046 = vadd.f32 %v815, %v1045
      %v1047 = vpop.f32.mrb[0].mxu0
      %v1048 = vadd.f32 %v815, %v1047
      %v1049 = vpop.f32.mrb[0].mxu0
      %v1050 = vadd.f32 %v820, %v1049
      %v1051 = vpop.f32.mrb[0].mxu0
      %v1052 = vadd.f32 %v820, %v1051
      %1053 = vmatprep.mubr.bf16.mxu0 0
      %1054 = vmatmul.mubr.bf16.gmra.mrb[0].mxu0 %v999
      %v1055 = vpop.f32.mrb[0].mxu0
      %v1056 = vadd.f32 %v825, %v1055
      %v1057 = vpop.f32.mrb[0].mxu0
      %v1058 = vadd.f32 %v825, %v1057
      %v1059 = vpop.f32.mrb[0].mxu0
      %v1060 = vadd.f32 %v830, %v1059
      %v1061 = vpop.f32.mrb[0].mxu0
      %v1062 = vadd.f32 %v830, %v1061
      %1063 = vdwg.mxu0
      %1064 = vmatprep.subr.bf16.mxu0 %v931
      %1065 = vmatpush1.bf16.msra.mxu0 %v930
      %1066 = vmatprep.subr.bf16.mxu0 %v939
      %1067 = vmatpush1.bf16.msra.mxu0 %v938
      %1068 = vmatprep.subr.bf16.mxu0 %v947
      %1069 = vmatpush1.bf16.msra.mxu0 %v946
      %1070 = vmatprep.subr.bf16.mxu0 %v955
      %1071 = vmatpush1.bf16.msra.mxu0 %v954
      %1072 = vmatprep.subr.bf16.mxu0 0
      %1073 = vmatpush1.bf16.msra.mxu0 0
      %1074 = vmatprep.subr.bf16.mxu0 0
      %1075 = vmatpush1.bf16.msra.mxu0 0
      %1076 = vmatprep.subr.bf16.mxu0 0
      %1077 = vmatpush1.bf16.msra.mxu0 0
      %1078 = vmatprep.subr.bf16.mxu0 0
      %1079 = vmatpush1.bf16.msra.mxu0 0
      %1080 = vmatprep.subr.bf16.mxu0 0
      %1081 = vmatpush1.bf16.msra.mxu0 0
      %1082 = vmatprep.subr.bf16.mxu0 0
      %1083 = vmatpush1.bf16.msra.mxu0 0
      %1084 = vmatprep.subr.bf16.mxu0 0
      %1085 = vmatpush1.bf16.msra.mxu0 0
      %1086 = vmatprep.subr.bf16.mxu0 0
      %1087 = vmatpush1.bf16.msra.mxu0 0
      %1088 = vmatprep.subr.bf16.mxu0 0
      %1089 = vmatpush1.bf16.msra.mxu0 0
      %1090 = vmatprep.subr.bf16.mxu0 0
      %1091 = vmatpush1.bf16.msra.mxu0 0
      %1092 = vmatprep.subr.bf16.mxu0 0
      %1093 = vmatpush1.bf16.msra.mxu0 0
      %1094 = vmatprep.subr.bf16.mxu0 0
      %1095 = vmatpush1.bf16.msra.mxu0 0
      %1096 = vmatprep.mubr.bf16.mxu0 0
      %1097 = vmatmul.mubr.bf16.gmra.mrb[0].mxu0 %v993
      %v1098 = vpop.f32.mrb[0].mxu0
      %v1099 = vadd.f32 %v805, %v1098
      %v1100 = vpop.f32.mrb[0].mxu0
      %v1101 = vadd.f32 %v805, %v1100
      %v1102 = vpop.f32.mrb[0].mxu0
      %v1103 = vadd.f32 %v810, %v1102
      %v1104 = vpop.f32.mrb[0].mxu0
      %v1105 = vadd.f32 %v810, %v1104
      %1106 = vmatprep.mubr.bf16.mxu0 0
      %1107 = vmatmul.mubr.bf16.gmra.mrb[0].mxu0 %v996
      %v1108 = vpop.f32.mrb[0].mxu0
      %v1109 = vadd.f32 %v815, %v1108
      %v1110 = vpop.f32.mrb[0].mxu0
      %v1111 = vadd.f32 %v815, %v1110
      %v1112 = vpop.f32.mrb[0].mxu0
      %v1113 = vadd.f32 %v820, %v1112
      %v1114 = vpop.f32.mrb[0].mxu0
      %v1115 = vadd.f32 %v820, %v1114
      %1116 = vmatprep.mubr.bf16.mxu0 0
      %1117 = vmatmul.mubr.bf16.gmra.mrb[0].mxu0 %v999
      %v1118 = vpop.f32.mrb[0].mxu0
      %v1119 = vadd.f32 %v825, %v1118
      %v1120 = vpop.f32.mrb[0].mxu0
      %v1121 = vadd.f32 %v825, %v1120
      %v1122 = vpop.f32.mrb[0].mxu0
      %v1123 = vadd.f32 %v830, %v1122
      %v1124 = vpop.f32.mrb[0].mxu0
      %v1125 = vadd.f32 %v830, %v1124
      %1126 = vdwg.mxu0
      %1127 = vmatprep.subr.bf16.mxu0 %v933
      %1128 = vmatpush1.bf16.msra.mxu0 %v932
      %1129 = vmatprep.subr.bf16.mxu0 %v941
      %1130 = vmatpush1.bf16.msra.mxu0 %v940
      %1131 = vmatprep.subr.bf16.mxu0 %v949
      %1132 = vmatpush1.bf16.msra.mxu0 %v948
      %1133 = vmatprep.subr.bf16.mxu0 %v957
      %1134 = vmatpush1.bf16.msra.mxu0 %v956
      %1135 = vmatprep.subr.bf16.mxu0 0
      %1136 = vmatpush1.bf16.msra.mxu0 0
      %1137 = vmatprep.subr.bf16.mxu0 0
      %1138 = vmatpush1.bf16.msra.mxu0 0
      %1139 = vmatprep.subr.bf16.mxu0 0
      %1140 = vmatpush1.bf16.msra.mxu0 0
      %1141 = vmatprep.subr.bf16.mxu0 0
      %1142 = vmatpush1.bf16.msra.mxu0 0
      %1143 = vmatprep.subr.bf16.mxu0 0
      %1144 = vmatpush1.bf16.msra.mxu0 0
      %1145 = vmatprep.subr.bf16.mxu0 0
      %1146 = vmatpush1.bf16.msra.mxu0 0
      %1147 = vmatprep.subr.bf16.mxu0 0
      %1148 = vmatpush1.bf16.msra.mxu0 0
      %1149 = vmatprep.subr.bf16.mxu0 0
      %1150 = vmatpush1.bf16.msra.mxu0 0
      %1151 = vmatprep.subr.bf16.mxu0 0
      %1152 = vmatpush1.bf16.msra.mxu0 0
      %1153 = vmatprep.subr.bf16.mxu0 0
      %1154 = vmatpush1.bf16.msra.mxu0 0
      %1155 = vmatprep.subr.bf16.mxu0 0
      %1156 = vmatpush1.bf16.msra.mxu0 0
      %1157 = vmatprep.subr.bf16.mxu0 0
      %1158 = vmatpush1.bf16.msra.mxu0 0
      %1159 = vmatprep.mubr.bf16.mxu0 0
      %1160 = vmatmul.mubr.bf16.gmra.mrb[0].mxu0 %v993
      %v1161 = vpop.f32.mrb[0].mxu0
      %v1162 = vadd.f32 %v805, %v1161
      %v1163 = vpop.f32.mrb[0].mxu0
      %v1164 = vadd.f32 %v805, %v1163
      %v1165 = vpop.f32.mrb[0].mxu0
      %v1166 = vadd.f32 %v810, %v1165
      %v1167 = vpop.f32.mrb[0].mxu0
      %v1168 = vadd.f32 %v810, %v1167
      %1169 = vmatprep.mubr.bf16.mxu0 0
      %1170 = vmatmul.mubr.bf16.gmra.mrb[0].mxu0 %v996
      %v1171 = vpop.f32.mrb[0].mxu0
      %v1172 = vadd.f32 %v815, %v1171
      %v1173 = vpop.f32.mrb[0].mxu0
      %v1174 = vadd.f32 %v815, %v1173
      %v1175 = vpop.f32.mrb[0].mxu0
      %v1176 = vadd.f32 %v820, %v1175
      %v1177 = vpop.f32.mrb[0].mxu0
      %v1178 = vadd.f32 %v820, %v1177
      %1179 = vmatprep.mubr.bf16.mxu0 0
      %1180 = vmatmul.mubr.bf16.gmra.mrb[0].mxu0 %v999
      %v1181 = vpop.f32.mrb[0].mxu0
      %v1182 = vadd.f32 %v825, %v1181
      %v1183 = vpop.f32.mrb[0].mxu0
      %v1184 = vadd.f32 %v825, %v1183
      %v1185 = vpop.f32.mrb[0].mxu0
      %v1186 = vadd.f32 %v830, %v1185
      %v1187 = vpop.f32.mrb[0].mxu0
      %v1188 = vadd.f32 %v830, %v1187
      %1189 = vdwg.mxu0
      %1190 = vmatprep.subr.bf16.mxu0 %v935
      %1191 = vmatpush1.bf16.msra.mxu0 %v934
      %1192 = vmatprep.subr.bf16.mxu0 %v943
      %1193 = vmatpush1.bf16.msra.mxu0 %v942
      %1194 = vmatprep.subr.bf16.mxu0 %v951
      %1195 = vmatpush1.bf16.msra.mxu0 %v950
      %1196 = vmatprep.subr.bf16.mxu0 %v959
      %1197 = vmatpush1.bf16.msra.mxu0 %v958
      %1198 = vmatprep.subr.bf16.mxu0 0
      %1199 = vmatpush1.bf16.msra.mxu0 0
      %1200 = vmatprep.subr.bf16.mxu0 0
      %1201 = vmatpush1.bf16.msra.mxu0 0
      %1202 = vmatprep.subr.bf16.mxu0 0
      %1203 = vmatpush1.bf16.msra.mxu0 0
      %1204 = vmatprep.subr.bf16.mxu0 0
      %1205 = vmatpush1.bf16.msra.mxu0 0
      %1206 = vmatprep.subr.bf16.mxu0 0
      %1207 = vmatpush1.bf16.msra.mxu0 0
      %1208 = vmatprep.subr.bf16.mxu0 0
      %1209 = vmatpush1.bf16.msra.mxu0 0
      %1210 = vmatprep.subr.bf16.mxu0 0
      %1211 = vmatpush1.bf16.msra.mxu0 0
      %1212 = vmatprep.subr.bf16.mxu0 0
      %1213 = vmatpush1.bf16.msra.mxu0 0
      %1214 = vmatprep.subr.bf16.mxu0 0
      %1215 = vmatpush1.bf16.msra.mxu0 0
      %1216 = vmatprep.subr.bf16.mxu0 0
      %1217 = vmatpush1.bf16.msra.mxu0 0
      %1218 = vmatprep.subr.bf16.mxu0 0
      %1219 = vmatpush1.bf16.msra.mxu0 0
      %1220 = vmatprep.subr.bf16.mxu0 0
      %1221 = vmatpush1.bf16.msra.mxu0 0
      %1222 = vmatprep.mubr.bf16.mxu0 0
      %1223 = vmatmul.mubr.bf16.gmra.mrb[0].mxu0 %v993
      %v1224 = vpop.f32.mrb[0].mxu0
      %v1225 = vadd.f32 %v805, %v1224
      %v1226 = vpop.f32.mrb[0].mxu0
      %v1227 = vadd.f32 %v805, %v1226
      %v1228 = vpop.f32.mrb[0].mxu0
      %v1229 = vadd.f32 %v810, %v1228
      %v1230 = vpop.f32.mrb[0].mxu0
      %v1231 = vadd.f32 %v810, %v1230
      %1232 = vmatprep.mubr.bf16.mxu0 0
      %1233 = vmatmul.mubr.bf16.gmra.mrb[0].mxu0 %v996
      %v1234 = vpop.f32.mrb[0].mxu0
      %v1235 = vadd.f32 %v815, %v1234
      %v1236 = vpop.f32.mrb[0].mxu0
      %v1237 = vadd.f32 %v815, %v1236
      %v1238 = vpop.f32.mrb[0].mxu0
      %v1239 = vadd.f32 %v820, %v1238
      %v1240 = vpop.f32.mrb[0].mxu0
      %v1241 = vadd.f32 %v820, %v1240
      %1242 = vmatprep.mubr.bf16.mxu0 0
      %1243 = vmatmul.mubr.bf16.gmra.mrb[0].mxu0 %v999
      %v1244 = vpop.f32.mrb[0].mxu0
      %v1245 = vadd.f32 %v825, %v1244
      %v1246 = vpop.f32.mrb[0].mxu0
      %v1247 = vadd.f32 %v825, %v1246
      %v1248 = vpop.f32.mrb[0].mxu0
      %v1249 = vadd.f32 %v830, %v1248
      %v1250 = vpop.f32.mrb[0].mxu0
      %v1251 = vadd.f32 %v830, %v1250
      %1252 = vdwg.mxu0
      %1253 = vst [vmem:[%s197] sm:$0xff] %v1036
      %1254 = vst [vmem:[%s197 + $0x8] sm:$0xff] %v1038
      %1255 = vst [vmem:[%s197 + $0x10] sm:$0xff] %v1099
      %1256 = vst [vmem:[%s197 + $0x18] sm:$0xff] %v1101
      %1257 = vst [vmem:[%s197 + $0x20] sm:$0xff] %v1162
      %1258 = vst [vmem:[%s197 + $0x28] sm:$0xff] %v1164
      %1259 = vst [vmem:[%s197 + $0x30] sm:$0xff] %v1225
      %1260 = vst [vmem:[%s197 + $0x38] sm:$0xff] %v1227
      %1261 = vst [vmem:[%s197 + $0x40] sm:$0xff] %v1040
      %1262 = vst [vmem:[%s197 + $0x48] sm:$0xff] %v1042
      %1263 = vst [vmem:[%s197 + $0x50] sm:$0xff] %v1103
      %1264 = vst [vmem:[%s197 + $0x58] sm:$0xff] %v1105
      %1265 = vst [vmem:[%s197 + $0x60] sm:$0xff] %v1166
      %1266 = vst [vmem:[%s197 + $0x68] sm:$0xff] %v1168
      %1267 = vst [vmem:[%s197 + $0x70] sm:$0xff] %v1229
      %1268 = vst [vmem:[%s197 + $0x78] sm:$0xff] %v1231
      %1269 = vst [vmem:[%s197 + $0x80] sm:$0xff] %v1046
      %1270 = vst [vmem:[%s197 + $0x88] sm:$0xff] %v1048
      %1271 = vst [vmem:[%s197 + $0x90] sm:$0xff] %v1109
      %1272 = vst [vmem:[%s197 + $0x98] sm:$0xff] %v1111
      %1273 = vst [vmem:[%s197 + $0xa0] sm:$0xff] %v1172
      %1274 = vst [vmem:[%s197 + $0xa8] sm:$0xff] %v1174
      %1275 = vst [vmem:[%s197 + $0xb0] sm:$0xff] %v1235
      %1276 = vst [vmem:[%s197 + $0xb8] sm:$0xff] %v1237
      %1277 = vst [vmem:[%s197 + $0xc0] sm:$0xff] %v1050
      %1278 = vst [vmem:[%s197 + $0xc8] sm:$0xff] %v1052
      %1279 = vst [vmem:[%s197 + $0xd0] sm:$0xff] %v1113
      %1280 = vst [vmem:[%s197 + $0xd8] sm:$0xff] %v1115
      %1281 = vst [vmem:[%s197 + $0xe0] sm:$0xff] %v1176
      %1282 = vst [vmem:[%s197 + $0xe8] sm:$0xff] %v1178
      %1283 = vst [vmem:[%s197 + $0xf0] sm:$0xff] %v1239
      %1284 = vst [vmem:[%s197 + $0xf8] sm:$0xff] %v1241
      %1285 = vst [vmem:[%s197 + $0x100] sm:$0xff] %v1056
      %1286 = vst [vmem:[%s197 + $0x108] sm:$0xff] %v1058
      %1287 = vst [vmem:[%s197 + $0x110] sm:$0xff] %v1119
      %1288 = vst [vmem:[%s197 + $0x118] sm:$0xff] %v1121
      %1289 = vst [vmem:[%s197 + $0x120] sm:$0xff] %v1182
      %1290 = vst [vmem:[%s197 + $0x128] sm:$0xff] %v1184
      %1291 = vst [vmem:[%s197 + $0x130] sm:$0xff] %v1245
      %1292 = vst [vmem:[%s197 + $0x138] sm:$0xff] %v1247
      %1293 = vst [vmem:[%s197 + $0x140] sm:$0x1] %v1060
      %1294 = vst [vmem:[%s197 + $0x148] sm:$0x1] %v1062
      %1295 = vst [vmem:[%s197 + $0x150] sm:$0x1] %v1123
      %1296 = vst [vmem:[%s197 + $0x158] sm:$0x1] %v1125
      %1297 = vst [vmem:[%s197 + $0x160] sm:$0x1] %v1186
      %1298 = vst [vmem:[%s197 + $0x168] sm:$0x1] %v1188
      %1299 = vst [vmem:[%s197 + $0x170] sm:$0x1] %v1249
      %1300 = vst [vmem:[%s197 + $0x178] sm:$0x1] %v1251
      %p1301 = scmp.lt.s32.totalorder %s15, 1
      %s1302 = scalar_select %p1301, %s15, 1
      %s1303 = smul.addr %s1302, 48
      %s1304 = smul.addr %s1303, 8
      %s1305 = scalar_lea.vmem %s4, %s1304
      // Predicated region
      $region37: #{seg_seg_forward.1} parent=35 // pred_check
        %p1306 = pneg %p122
      $region38: #{seg_seg_forward.1} parent=35 // pred_check_branch
        %1308 = sbr.rel (%p1306) target = $region40
      $region39: #{seg_seg_forward.1} parent=35 // pred_region
        _
      $region40: #{seg_seg_forward.1} parent=35 // pred_fallthru
        _
    $region36: #{seg_seg_forward.1} parent=5 // pred_fallthru
      _
    %p1309 = scmp.le.s32.totalorder 2, %s10
    // Predicated region
    $region41: #{seg_seg_forward.1} parent=5 // pred_check
      %p1310 = pneg %p1309
    $region42: #{seg_seg_forward.1} parent=5 // pred_check_branch
      %1312 = sbr.rel (%p1310) target = $region44
    $region43: #{seg_seg_forward.1} parent=5 // pred_region
      %s1313 = ssub.s32 %s10, 2
      // Predicated region
      $region45: #{seg_seg_forward.1} parent=43 // pred_check
        %p1314 = pneg %p128
      $region46: #{seg_seg_forward.1} parent=43 // pred_check_branch
        %1316 = sbr.rel (%p1314) target = $region48
      $region47: #{seg_seg_forward.1} parent=43 // pred_region
        %p1317 = scmp.lt.s32.totalorder %s16, 1
        %s1318 = scalar_select %p1317, %s16, 1
        %s1319 = smul.addr %s1318, 48
        %s1320 = smul.addr %s1319, 8
        %s1321 = scalar_lea.vmem %s4, %s1320
      $region48: #{seg_seg_forward.1} parent=43 // pred_fallthru
        _
    $region44: #{seg_seg_forward.1} parent=5 // pred_fallthru
      _
  $region6: #{seg_seg_forward.1} parent=0 // loop_footer
    %s14 = sadd.s32 1, %s10
  $region7: #{seg_seg_forward.1} parent=0 // loop_footer_branch
    %9 = sbr.rel target = $region3
  $region8: #{seg_seg_forward.1} parent=0 // loop_exit
    _

</llo_original>
